<compile_context>
chip_gen: v7x
topology: tpu7x:2x2x1
jax: 0.10.0
libtpu: 0.0.40
codegen_flags: <defaults>
</compile_context>

<pallas_src>
import functools

import jax
import jax.numpy as jnp
from jax import lax
from jax.experimental import pallas as pl
from jax.experimental.pallas import tpu as pltpu


def _round_up(n, m):
    return ((n + m - 1) // m) * m


def _confidence_mlp_kernel(x_ref, w1_ref, b1_ref, w2_ref, b2_ref, w3_ref, b3_ref,
                           out_ref, *, entropy_threshold, max_iter,
                           batch, tile_b, mask_rows):
    # ---- row mask (only emitted when the batch is actually padded) ----------
    if mask_rows:
        row_ids = (lax.broadcasted_iota(jnp.int32, (tile_b, 1), 0)
                   + pl.program_id(0) * tile_b)
        row_valid = row_ids < batch
        n_valid = jnp.sum(row_valid.astype(jnp.float32))
    else:
        row_valid = None
        n_valid = jnp.float32(tile_b)

    # ---- resident weights / biases (single load per tile) -------------------
    w1 = w1_ref[...]
    w2 = w2_ref[...]
    w3 = w3_ref[...]
    b1 = b1_ref[...]
    b2 = b2_ref[...]
    b3 = b3_ref[...]
    # Biases are added as (1, N); sublane broadcast in the add is cheap and
    # avoids materializing (tile_b, N) copies.

    # fc1 + relu: x arrives as bf16 from the wrapper; f32 MXU accumulation.
    x0 = jnp.maximum(
        jnp.dot(x_ref[...], w1, preferred_element_type=jnp.float32) + b1,
        0.0)

    # mean(entropy) < thr  <=>  sum(entropy) < thr * n_valid   (no divide)
    thr_times_n = jnp.float32(entropy_threshold) * n_valid

    def cond_fn(carry):
        it, done, _ = carry
        return jnp.logical_and(it < max_iter, done == 0)

    def body_fn(carry):
        it, _, x_cur = carry

        # fc2 + relu
        x_prime = jnp.maximum(
            jnp.dot(x_cur.astype(jnp.bfloat16), w2,
                    preferred_element_type=jnp.float32) + b2,
            0.0)
        # fc3 -> logits.  Padded output lanes come out at ~-1e30 (baked into
        # b3), so no lane-mask selects are needed below.
        logits = jnp.dot(x_prime.astype(jnp.bfloat16), w3,
                         preferred_element_type=jnp.float32) + b3

        # Last write wins: on break these logits are the ones PyTorch returns.
        out_ref[...] = logits.astype(out_ref.dtype)

        # Softmax entropy via logsumexp: H = log(S) - sum((l-m)*e) / S.
        # Padded lanes: exp(-1e30 - m) == 0, and (-1e30)*0 == -0 (finite, no NaN).
        m = jnp.max(logits, axis=1, keepdims=True)
        sh = logits - m
        e = jnp.exp(sh)
        s = jnp.sum(e, axis=1, keepdims=True)
        t = jnp.sum(sh * e, axis=1, keepdims=True)
        ent = jnp.log(s) - t * pl.reciprocal(s, approx=True)   # (tile_b, 1)

        if row_valid is not None:
            ent_sum = jnp.sum(jnp.where(row_valid, ent, 0.0))
        else:
            ent_sum = jnp.sum(ent)

        stop = ent_sum < thr_times_n
        # When stop fires, the loop exits before x_next is ever read, so the
        # residual update needs no select.
        return it + 1, stop.astype(jnp.int32), x_cur + x_prime

    lax.while_loop(cond_fn, body_fn, (jnp.int32(0), jnp.int32(0), x0))


def prepare_params(w1, b1, w2, b2, w3, b3):
    """One-time padding + bf16 cast of the weights/biases (hoisted out of the
    per-call path).  Weights are (in_features, out_features) = nn.Linear
    weight.T; biases are (out_features,) or (1, out_features)."""
    f32, bf16 = jnp.float32, jnp.bfloat16
    in_dim, hid = w1.shape
    out_dim = w3.shape[1]

    in_pad = _round_up(in_dim, 128)
    hid_pad = _round_up(hid, 128)
    out_pad = _round_up(out_dim, 128)

    w1p = jnp.zeros((in_pad, hid_pad), bf16).at[:in_dim, :hid].set(w1.astype(bf16))
    w2p = jnp.zeros((hid_pad, hid_pad), bf16).at[:hid, :hid].set(w2.astype(bf16))
    w3p = jnp.zeros((hid_pad, out_pad), bf16).at[:hid, :out_dim].set(w3.astype(bf16))
    b1p = jnp.zeros((1, hid_pad), f32).at[:, :hid].set(b1.reshape(1, -1).astype(f32))
    b2p = jnp.zeros((1, hid_pad), f32).at[:, :hid].set(b2.reshape(1, -1).astype(f32))
    # Lane mask baked in: padded logit lanes get -1e30 (finite, not -inf) so
    # exp() underflows them to exactly 0 inside the kernel.  The padded output
    # buffer therefore contains ~-1e30 in those lanes and MUST be sliced
    # [:batch, :out_dim] before use (the wrapper does).
    b3p = jnp.full((1, out_pad), -1e30, f32).at[:, :out_dim].set(b3.reshape(1, -1).astype(f32))

    dims = dict(in_dim=in_dim, hid=hid, out_dim=out_dim,
                in_pad=in_pad, hid_pad=hid_pad, out_pad=out_pad)
    params = tuple(jax.device_put(p) for p in (w1p, b1p, w2p, b2p, w3p, b3p))
    return params, dims


def confidence_mlp(x, params, dims, *, entropy_threshold=0.5, max_iter=5,
                   max_tile_b=2048):
    """Pallas TPU forward of ConfidenceBasedMLP using prepared (padded) params."""
    assert max_iter >= 1, "max_iter must be >= 1 (PyTorch would return undefined logits)"
    w1p, b1p, w2p, b2p, w3p, b3p = params
    batch, in_dim = x.shape
    assert in_dim == dims["in_dim"]
    in_pad, hid_pad, out_pad = dims["in_pad"], dims["hid_pad"], dims["out_pad"]
    out_dim = dims["out_dim"]
    f32, bf16 = jnp.float32, jnp.bfloat16

    # Batch tiling: one tile (exact global mean-entropy semantics) when the
    # batch fits; otherwise tile the batch (per-tile break, see TODO above).
    if batch <= max_tile_b:
        tile_b = batch
        b_pad = batch
    else:
        tile_b = max(8, (max_tile_b // 8) * 8)
        b_pad = _round_up(batch, tile_b)
    num_tiles = b_pad // tile_b
    mask_rows = b_pad != batch

    # x padded and cast to bf16 here: halves the streamed-input DMA bytes.
    # Zero-padding is exact: padded lanes/rows contribute exactly 0 to every
    # matmul / relu / residual and padded rows are masked out of the entropy sum.
    xp = jnp.zeros((b_pad, in_pad), bf16).at[:batch, :in_dim].set(x.astype(bf16))

    kernel = functools.partial(
        _confidence_mlp_kernel,
        entropy_threshold=float(entropy_threshold),
        max_iter=int(max_iter),
        batch=batch,
        tile_b=tile_b,
        mask_rows=mask_rows,
    )

    def resident(shape):
        # Full array as one block, same block every grid step -> VMEM-resident.
        return pl.BlockSpec(shape, lambda i: (0, 0))

    out_padded = pl.pallas_call(
        kernel,
        out_shape=jax.ShapeDtypeStruct((b_pad, out_pad), f32),
        grid=(num_tiles,),
        in_specs=[
            pl.BlockSpec((tile_b, in_pad), lambda i: (i, 0)),
            resident((in_pad, hid_pad)),
            resident((1, hid_pad)),
            resident((hid_pad, hid_pad)),
            resident((1, hid_pad)),
            resident((hid_pad, out_pad)),
            resident((1, out_pad)),
        ],
        out_specs=pl.BlockSpec((tile_b, out_pad), lambda i: (i, 0)),
        compiler_params=pltpu.CompilerParams(
            dimension_semantics=("parallel",),
            vmem_limit_bytes=32 * 1024 * 1024,
        ),
    )(xp, w1p, b1p, w2p, b2p, w3p, b3p)

    return out_padded[:batch, :out_dim]


def confidence_mlp_ref(x, w1, b1, w2, b2, w3, b3, *, entropy_threshold=0.5,
                       max_iter=5):
    """Pure-JAX reference: PyTorch control flow, bf16 matmul / f32 accumulate
    numerics matching the kernel (elementwise math in f32, original entropy
    formula with the +1e-8 epsilon)."""
    bf16, f32 = jnp.bfloat16, jnp.float32

    def mm(a, w):
        return jnp.dot(a.astype(bf16), w.astype(bf16), preferred_element_type=f32)

    x = jnp.maximum(mm(x, w1) + b1.reshape(1, -1), 0.0)
    logits = None
    for _ in range(max_iter):
        x_prime = jnp.maximum(mm(x, w2) + b2.reshape(1, -1), 0.0)
        logits = mm(x_prime, w3) + b3.reshape(1, -1)
        probs = jax.nn.softmax(logits, axis=1)
        entropy = -jnp.sum(probs * jnp.log(probs + 1e-8), axis=1)
        if float(jnp.mean(entropy)) < entropy_threshold:
            break
        x = x + x_prime
    return logits


if __name__ == "__main__":
    input_size, hidden_size, output_size = 16, 32, 8
    key = jax.random.PRNGKey(0)
    kx, k1, k2, k3, kb1, kb2, kb3, kx2 = jax.random.split(key, 8)

    # Weights stored as (in, out) = PyTorch nn.Linear weight.T
    w1 = jax.random.normal(k1, (input_size, hidden_size), jnp.float32) / input_size ** 0.5
    w2 = jax.random.normal(k2, (hidden_size, hidden_size), jnp.float32) / hidden_size ** 0.5
    w3 = jax.random.normal(k3, (hidden_size, output_size), jnp.float32) / hidden_size ** 0.5
    b1 = jax.random.normal(kb1, (1, hidden_size), jnp.float32) * 0.01
    b2 = jax.random.normal(kb2, (1, hidden_size), jnp.float32) * 0.01
    b3 = jax.random.normal(kb3, (1, output_size), jnp.float32) * 0.01

    # Weight padding/cast hoisted out of the hot path: done once here.
    params, dims = prepare_params(w1, b1, w2, b2, w3, b3)

    # Case 1: batch=8, threshold never reached -> runs all max_iter iterations.
    x = jax.random.normal(kx, (8, input_size), jnp.float32)
    out1 = jax.block_until_ready(
        confidence_mlp(x, params, dims, entropy_threshold=0.5, max_iter=5))
    ref1 = confidence_mlp_ref(x, w1, b1, w2, b2, w3, b3, entropy_threshold=0.5, max_iter=5)
    assert out1.shape == (8, output_size)
    assert jnp.allclose(out1, ref1, atol=5e-3, rtol=5e-3), "case1 mismatch vs reference"

    # Case 2: high threshold -> confidence break fires on the first iteration.
    out2 = jax.block_until_ready(
        confidence_mlp(x, params, dims, entropy_threshold=10.0, max_iter=5))
    ref2 = confidence_mlp_ref(x, w1, b1, w2, b2, w3, b3, entropy_threshold=10.0, max_iter=5)
    assert jnp.allclose(out2, ref2, atol=5e-3, rtol=5e-3), "case2 mismatch vs reference"

    # Case 3: batch=20 tiled at tile_b=8 (multi-tile path, padded rows masked).
    # Threshold 0.0 is never reached, so per-tile and global break agree.
    x3 = jax.random.normal(kx2, (20, input_size), jnp.float32)
    out3 = jax.block_until_ready(
        confidence_mlp(x3, params, dims, entropy_threshold=0.0, max_iter=5,
                       max_tile_b=8))
    ref3 = confidence_mlp_ref(x3, w1, b1, w2, b2, w3, b3, entropy_threshold=0.0, max_iter=5)
    assert out3.shape == (20, output_size)
    assert jnp.allclose(out3, ref3, atol=5e-3, rtol=5e-3), "case3 mismatch vs reference"

    print("KERNEL_OK")
</pallas_src>

<mosaic_0001>
module attributes {stable_mosaic.version = 11 : i64} {
  func.func @_confidence_mlp_kernel(%arg0: i32, %arg1: memref<8x128xbf16, #tpu.memory_space<vmem>>, %arg2: memref<128x128xbf16, #tpu.memory_space<vmem>>, %arg3: memref<1x128xf32, #tpu.memory_space<vmem>>, %arg4: memref<128x128xbf16, #tpu.memory_space<vmem>>, %arg5: memref<1x128xf32, #tpu.memory_space<vmem>>, %arg6: memref<128x128xbf16, #tpu.memory_space<vmem>>, %arg7: memref<1x128xf32, #tpu.memory_space<vmem>>, %arg8: memref<8x128xf32, #tpu.memory_space<vmem>>) attributes {dimension_semantics = [#tpu.dimension_semantics<parallel>], iteration_bounds = array<i64: 1>, scalar_prefetch = 0 : i64, scratch_operands = 0 : i64, tpu.core_type = #tpu.core_type<tc>, window_params = [{transform_indices = @transform_0, window_bounds = array<i64: 8, 128>}, {pipeline_mode = #tpu.pipeline_mode<synchronous>, transform_indices = @transform_1, window_bounds = array<i64: 128, 128>}, {pipeline_mode = #tpu.pipeline_mode<synchronous>, transform_indices = @transform_2, window_bounds = array<i64: 1, 128>}, {pipeline_mode = #tpu.pipeline_mode<synchronous>, transform_indices = @transform_3, window_bounds = array<i64: 128, 128>}, {pipeline_mode = #tpu.pipeline_mode<synchronous>, transform_indices = @transform_4, window_bounds = array<i64: 1, 128>}, {pipeline_mode = #tpu.pipeline_mode<synchronous>, transform_indices = @transform_5, window_bounds = array<i64: 128, 128>}, {pipeline_mode = #tpu.pipeline_mode<synchronous>, transform_indices = @transform_6, window_bounds = array<i64: 1, 128>}, {transform_indices = @transform_7, window_bounds = array<i64: 8, 128>}]} {
    %c0 = arith.constant 0 : index
    %c0_0 = arith.constant 0 : index
    %0 = vector.load %arg2[%c0, %c0_0] : memref<128x128xbf16, #tpu.memory_space<vmem>>, vector<128x128xbf16>
    %c0_1 = arith.constant 0 : index
    %c0_2 = arith.constant 0 : index
    %1 = vector.load %arg4[%c0_1, %c0_2] : memref<128x128xbf16, #tpu.memory_space<vmem>>, vector<128x128xbf16>
    %c0_3 = arith.constant 0 : index
    %c0_4 = arith.constant 0 : index
    %2 = vector.load %arg6[%c0_3, %c0_4] : memref<128x128xbf16, #tpu.memory_space<vmem>>, vector<128x128xbf16>
    %c0_5 = arith.constant 0 : index
    %c0_6 = arith.constant 0 : index
    %3 = vector.load %arg3[%c0_5, %c0_6] : memref<1x128xf32, #tpu.memory_space<vmem>>, vector<1x128xf32>
    %c0_7 = arith.constant 0 : index
    %c0_8 = arith.constant 0 : index
    %4 = vector.load %arg5[%c0_7, %c0_8] : memref<1x128xf32, #tpu.memory_space<vmem>>, vector<1x128xf32>
    %c0_9 = arith.constant 0 : index
    %c0_10 = arith.constant 0 : index
    %5 = vector.load %arg7[%c0_9, %c0_10] : memref<1x128xf32, #tpu.memory_space<vmem>>, vector<1x128xf32>
    %c0_11 = arith.constant 0 : index
    %c0_12 = arith.constant 0 : index
    %6 = vector.load %arg1[%c0_11, %c0_12] : memref<8x128xbf16, #tpu.memory_space<vmem>>, vector<8x128xbf16>
    %cst = arith.constant dense<0.000000e+00> : vector<8x128xf32>
    %7 = tpu.matmul %6, %0, %cst {dimension_numbers = #tpu.dot_dimension_numbers<[1], [0], [0], [1], [0, 0, 1, 1], [], []>} : vector<8x128xbf16>, vector<128x128xbf16>, vector<8x128xf32> -> vector<8x128xf32>
    %8 = vector.broadcast %3 : vector<1x128xf32> to vector<8x128xf32>
    %9 = arith.addf %7, %8 : vector<8x128xf32>
    %cst_13 = arith.constant 0.000000e+00 : f32
    %10 = vector.broadcast %cst_13 : f32 to vector<8x128xf32>
    %11 = arith.maximumf %9, %10 : vector<8x128xf32>
    %cst_14 = arith.constant 5.000000e-01 : f32
    %cst_15 = arith.constant 8.000000e+00 : f32
    %12 = arith.mulf %cst_14, %cst_15 : f32
    %c0_i32 = arith.constant 0 : i32
    %c0_i32_16 = arith.constant 0 : i32
    %13:3 = scf.while (%arg9 = %c0_i32, %arg10 = %c0_i32_16, %arg11 = %11) : (i32, i32, vector<8x128xf32>) -> (i32, i32, vector<8x128xf32>) {
      %c5_i32 = arith.constant 5 : i32
      %14 = arith.cmpi slt, %arg9, %c5_i32 : i32
      %c0_i32_17 = arith.constant 0 : i32
      %15 = arith.cmpi eq, %arg10, %c0_i32_17 : i32
      %16 = arith.andi %14, %15 : i1
      scf.condition(%16) %arg9, %arg10, %arg11 : i32, i32, vector<8x128xf32>
    } do {
    ^bb0(%arg9: i32, %arg10: i32, %arg11: vector<8x128xf32>):
      %14 = arith.truncf %arg11 : vector<8x128xf32> to vector<8x128xbf16>
      %cst_17 = arith.constant dense<0.000000e+00> : vector<8x128xf32>
      %15 = tpu.matmul %14, %1, %cst_17 {dimension_numbers = #tpu.dot_dimension_numbers<[1], [0], [0], [1], [0, 0, 1, 1], [], []>} : vector<8x128xbf16>, vector<128x128xbf16>, vector<8x128xf32> -> vector<8x128xf32>
      %16 = vector.broadcast %4 : vector<1x128xf32> to vector<8x128xf32>
      %17 = arith.addf %15, %16 : vector<8x128xf32>
      %cst_18 = arith.constant 0.000000e+00 : f32
      %18 = vector.broadcast %cst_18 : f32 to vector<8x128xf32>
      %19 = arith.maximumf %17, %18 : vector<8x128xf32>
      %20 = arith.truncf %19 : vector<8x128xf32> to vector<8x128xbf16>
      %cst_19 = arith.constant dense<0.000000e+00> : vector<8x128xf32>
      %21 = tpu.matmul %20, %2, %cst_19 {dimension_numbers = #tpu.dot_dimension_numbers<[1], [0], [0], [1], [0, 0, 1, 1], [], []>} : vector<8x128xbf16>, vector<128x128xbf16>, vector<8x128xf32> -> vector<8x128xf32>
      %22 = vector.broadcast %5 : vector<1x128xf32> to vector<8x128xf32>
      %23 = arith.addf %21, %22 : vector<8x128xf32>
      %c0_20 = arith.constant 0 : index
      %c0_21 = arith.constant 0 : index
      %24 = vector.load %arg8[%c0_20, %c0_21] : memref<8x128xf32, #tpu.memory_space<vmem>>, vector<8x128xf32>
      tpu.vector_store %arg8[%c0_20, %c0_21], %23 {strides = array<i32>} : memref<8x128xf32, #tpu.memory_space<vmem>>, vector<8x128xf32>,
      %cst_22 = arith.constant dense<0xFF800000> : vector<8xf32>
      %25 = vector.multi_reduction <maximumf>, %23, %cst_22 [1] : vector<8x128xf32> to vector<8xf32>
      %26 = vector.shape_cast %25 : vector<8xf32> to vector<8x1xf32>
      %27 = vector.broadcast %26 : vector<8x1xf32> to vector<8x128xf32>
      %28 = arith.subf %23, %27 : vector<8x128xf32>
      %29 = math.exp %28 : vector<8x128xf32>
      %cst_23 = arith.constant dense<0.000000e+00> : vector<8xf32>
      %30 = vector.multi_reduction <add>, %29, %cst_23 [1] : vector<8x128xf32> to vector<8xf32>
      %31 = vector.shape_cast %30 : vector<8xf32> to vector<8x1xf32>
      %32 = arith.mulf %28, %29 : vector<8x128xf32>
      %cst_24 = arith.constant dense<0.000000e+00> : vector<8xf32>
      %33 = vector.multi_reduction <add>, %32, %cst_24 [1] : vector<8x128xf32> to vector<8xf32>
      %34 = vector.shape_cast %33 : vector<8xf32> to vector<8x1xf32>
      %35 = math.log %31 : vector<8x1xf32>
      %36 = tpu.reciprocal %31 {approx = true} : vector<8x1xf32> -> vector<8x1xf32>
      %37 = arith.mulf %34, %36 : vector<8x1xf32>
      %38 = arith.subf %35, %37 : vector<8x1xf32>
      %39 = vector.shape_cast %38 : vector<8x1xf32> to vector<1x8x1xf32>
      %cst_25 = arith.constant dense<0.000000e+00> : vector<1xf32>
      %40 = vector.multi_reduction <add>, %39, %cst_25 [1, 2] : vector<1x8x1xf32> to vector<1xf32>
      %41 = vector.shape_cast %40 : vector<1xf32> to vector<1x1x1xf32>
      %42 = vector.extract %41[0, 0, 0] : f32 from vector<1x1x1xf32>
      %43 = arith.cmpf olt, %42, %12 : f32
      %c1_i32 = arith.constant 1 : i32
      %44 = arith.addi %arg9, %c1_i32 : i32
      %45 = arith.extui %43 : i1 to i32
      %46 = arith.addf %arg11, %19 : vector<8x128xf32>
      scf.yield %44, %45, %46 : i32, i32, vector<8x128xf32>
    }
    return
  }
  func.func @transform_0(%arg0: i32) -> (i32, i32) {
    %c0_i32 = arith.constant 0 : i32
    %c0_i32_0 = arith.constant 0 : i32
    return %arg0, %c0_i32 : i32, i32
  }
  func.func @transform_1(%arg0: i32) -> (i32, i32) {
    %c0_i32 = arith.constant 0 : i32
    %c0_i32_0 = arith.constant 0 : i32
    %c0_i32_1 = arith.constant 0 : i32
    return %c0_i32, %c0_i32_0 : i32, i32
  }
  func.func @transform_2(%arg0: i32) -> (i32, i32) {
    %c0_i32 = arith.constant 0 : i32
    %c0_i32_0 = arith.constant 0 : i32
    %c0_i32_1 = arith.constant 0 : i32
    return %c0_i32, %c0_i32_0 : i32, i32
  }
  func.func @transform_3(%arg0: i32) -> (i32, i32) {
    %c0_i32 = arith.constant 0 : i32
    %c0_i32_0 = arith.constant 0 : i32
    %c0_i32_1 = arith.constant 0 : i32
    return %c0_i32, %c0_i32_0 : i32, i32
  }
  func.func @transform_4(%arg0: i32) -> (i32, i32) {
    %c0_i32 = arith.constant 0 : i32
    %c0_i32_0 = arith.constant 0 : i32
    %c0_i32_1 = arith.constant 0 : i32
    return %c0_i32, %c0_i32_0 : i32, i32
  }
  func.func @transform_5(%arg0: i32) -> (i32, i32) {
    %c0_i32 = arith.constant 0 : i32
    %c0_i32_0 = arith.constant 0 : i32
    %c0_i32_1 = arith.constant 0 : i32
    return %c0_i32, %c0_i32_0 : i32, i32
  }
  func.func @transform_6(%arg0: i32) -> (i32, i32) {
    %c0_i32 = arith.constant 0 : i32
    %c0_i32_0 = arith.constant 0 : i32
    %c0_i32_1 = arith.constant 0 : i32
    return %c0_i32, %c0_i32_0 : i32, i32
  }
  func.func @transform_7(%arg0: i32) -> (i32, i32) {
    %c0_i32 = arith.constant 0 : i32
    %c0_i32_0 = arith.constant 0 : i32
    return %arg0, %c0_i32 : i32, i32
  }
}

</mosaic_0001>

<llo_original>
// kernel: tpu_custom_call.1
$region0: #{tpu_custom_call.1}
  #allocation0 [shape = 'u32[]', space=smem, size = 0x4, offset = 0x4, fixed_abs, tag = 'smem constant byte address 0x4 - core index']
  #allocation1 [shape = 'u32[144,128]{1,0:T(1,128)}', space=vmem, size = 0x12000, scoped, tag = 'internal scratch']
  %s0 = inlined_call_operand.hbm [shape: bf16[8,128], index: 0, kind: input, shape index: {}]
  %s1 = inlined_call_operand.hbm [shape: bf16[128,128], index: 1, kind: input, shape index: {}]
  %s2 = inlined_call_operand.vmem [shape: f32[1,128], index: 2, kind: input, shape index: {}]
  %s3 = inlined_call_operand.hbm [shape: bf16[128,128], index: 3, kind: input, shape index: {}]
  %s4 = inlined_call_operand.vmem [shape: f32[1,128], index: 4, kind: input, shape index: {}]
  %s5 = inlined_call_operand.hbm [shape: bf16[128,128], index: 5, kind: input, shape index: {}]
  %s6 = inlined_call_operand.vmem [shape: f32[1,128], index: 6, kind: input, shape index: {}]
  %s7 = inlined_call_operand.hbm [shape: f32[8,128], index: 7, kind: output, shape index: {}]
  %s8 = sld [smem:[#allocation0]]
  $region61: #{tpu_custom_call.1} parent=0
    _
  %s10 = ssub.s32 1, %s8
  %s11 = scalar_select 0, %s10, %s8
  $region1: #{tpu_custom_call.1} parent=0
    #allocation2 [shape = 'u8[2048]{0}', space=vmem, size = 0x800, scoped, tag = 'input window, operand 0, single buffered']
    #allocation3 [shape = 's32[1]{0}', space=sflag, size = 0x4, scoped, tag = 'scoped memory for tpu_custom_call.1']
    #allocation4 [shape = 's32[1]{0}', space=sflag, size = 0x4, scoped, tag = 'scoped memory for tpu_custom_call.1']
    #allocation5 [shape = 'u8[32768]{0}', space=vmem, size = 0x8000, scoped, tag = 'input window, operand 1, single buffered']
    #allocation6 [shape = 's32[1]{0}', space=sflag, size = 0x4, scoped, tag = 'scoped memory for tpu_custom_call.1']
    #allocation7 [shape = 'u8[32768]{0}', space=vmem, size = 0x8000, scoped, tag = 'input window, operand 3, single buffered']
    #allocation8 [shape = 'u8[32768]{0}', space=vmem, size = 0x8000, scoped, tag = 'input window, operand 5, single buffered']
    #allocation9 [shape = 's32[1]{0}', space=sflag, size = 0x4, scoped, tag = 'scoped memory for tpu_custom_call.1']
    #allocation10 [shape = 'u8[4096]{0}', space=vmem, size = 0x1000, scoped, tag = 'output window, operand 0, single buffered']
    %12 = vsyncpa [#allocation3], 0
    %13 = vsyncpa [#allocation6], 0
    %14 = vsyncpa [#allocation9], 0
    %15 = vsyncpa [#allocation4], 0
    // Predicated region
    $region2: #{tpu_custom_call.1} parent=1 // pred_check
      _
    $region3: #{tpu_custom_call.1} parent=1 // pred_check_branch
      %17 = sbr.rel (0) target = $region5
    $region4: #{tpu_custom_call.1} parent=1 // pred_region
      %s19 = ssub.s32 64, 64
      %20 = vsyncadd [#allocation3], %s19
      %s22 = sshll.u32 [#allocation2], 4
      %s23 = int_to_ptr.vmem [resolvable:$true] %s22
      %25 = dma.hbm_to_vmem [thread:$0]  %s0, 64, %s23, [#allocation3]
    $region5: #{tpu_custom_call.1} parent=1 // pred_fallthru
      _
    // Predicated region
    $region6: #{tpu_custom_call.1} parent=1 // pred_check
      _
    $region7: #{tpu_custom_call.1} parent=1 // pred_check_branch
      %27 = sbr.rel (0) target = $region9
    $region8: #{tpu_custom_call.1} parent=1 // pred_region
      %s29 = ssub.s32 1024, 1024
      %30 = vsyncadd [#allocation6], %s29
      %s31 = sshll.u32 [#allocation5], 4
      %s32 = int_to_ptr.vmem [resolvable:$true] %s31
      %37 = dma.hbm_to_vmem [thread:$0]  %s1, 1024, %s32, [#allocation6], 64, 64, 4
    $region9: #{tpu_custom_call.1} parent=1 // pred_fallthru
      _
    // Predicated region
    $region10: #{tpu_custom_call.1} parent=1 // pred_check
      _
    $region11: #{tpu_custom_call.1} parent=1 // pred_check_branch
      %39 = sbr.rel (0) target = $region13
    $region12: #{tpu_custom_call.1} parent=1 // pred_region
      _
    $region13: #{tpu_custom_call.1} parent=1 // pred_fallthru
      _
    // Predicated region
    $region14: #{tpu_custom_call.1} parent=1 // pred_check
      _
    $region15: #{tpu_custom_call.1} parent=1 // pred_check_branch
      %41 = sbr.rel (0) target = $region17
    $region16: #{tpu_custom_call.1} parent=1 // pred_region
      %s43 = ssub.s32 1024, 1024
      %44 = vsyncadd [#allocation6], %s43
      %s45 = sshll.u32 [#allocation7], 4
      %s46 = int_to_ptr.vmem [resolvable:$true] %s45
      %51 = dma.hbm_to_vmem [thread:$0]  %s3, 1024, %s46, [#allocation6], 64, 64, 4
    $region17: #{tpu_custom_call.1} parent=1 // pred_fallthru
      _
    // Predicated region
    $region18: #{tpu_custom_call.1} parent=1 // pred_check
      _
    $region19: #{tpu_custom_call.1} parent=1 // pred_check_branch
      %53 = sbr.rel (0) target = $region21
    $region20: #{tpu_custom_call.1} parent=1 // pred_region
      _
    $region21: #{tpu_custom_call.1} parent=1 // pred_fallthru
      _
    // Predicated region
    $region22: #{tpu_custom_call.1} parent=1 // pred_check
      _
    $region23: #{tpu_custom_call.1} parent=1 // pred_check_branch
      %55 = sbr.rel (0) target = $region25
    $region24: #{tpu_custom_call.1} parent=1 // pred_region
      %s57 = ssub.s32 1024, 1024
      %58 = vsyncadd [#allocation9], %s57
      %s59 = sshll.u32 [#allocation8], 4
      %s60 = int_to_ptr.vmem [resolvable:$true] %s59
      %65 = dma.hbm_to_vmem [thread:$0]  %s5, 1024, %s60, [#allocation9], 64, 64, 4
    $region25: #{tpu_custom_call.1} parent=1 // pred_fallthru
      _
    // Predicated region
    $region26: #{tpu_custom_call.1} parent=1 // pred_check
      _
    $region27: #{tpu_custom_call.1} parent=1 // pred_check_branch
      %67 = sbr.rel (0) target = $region29
    $region28: #{tpu_custom_call.1} parent=1 // pred_region
      _
    $region29: #{tpu_custom_call.1} parent=1 // pred_fallthru
      _
    // Predicated region
    $region30: #{tpu_custom_call.1} parent=1 // pred_check
      _
    $region31: #{tpu_custom_call.1} parent=1 // pred_check_branch
      %69 = sbr.rel (0) target = $region33
    $region32: #{tpu_custom_call.1} parent=1 // pred_region
      %70 = dma.done [#allocation3], 64
    $region33: #{tpu_custom_call.1} parent=1 // pred_fallthru
      _
    // Predicated region
    $region34: #{tpu_custom_call.1} parent=1 // pred_check
      _
    $region35: #{tpu_custom_call.1} parent=1 // pred_check_branch
      %72 = sbr.rel (0) target = $region37
    $region36: #{tpu_custom_call.1} parent=1 // pred_region
      %73 = dma.done [#allocation6], 1024
    $region37: #{tpu_custom_call.1} parent=1 // pred_fallthru
      _
    // Predicated region
    $region38: #{tpu_custom_call.1} parent=1 // pred_check
      _
    $region39: #{tpu_custom_call.1} parent=1 // pred_check_branch
      %75 = sbr.rel (0) target = $region41
    $region40: #{tpu_custom_call.1} parent=1 // pred_region
      %76 = dma.done [#allocation6], 1024
    $region41: #{tpu_custom_call.1} parent=1 // pred_fallthru
      _
    // Predicated region
    $region42: #{tpu_custom_call.1} parent=1 // pred_check
      _
    $region43: #{tpu_custom_call.1} parent=1 // pred_check_branch
      %78 = sbr.rel (0) target = $region45
    $region44: #{tpu_custom_call.1} parent=1 // pred_region
      %79 = dma.done [#allocation9], 1024
    $region45: #{tpu_custom_call.1} parent=1 // pred_fallthru
      _
    %v81 = vld [vmem:[#allocation5] sm:$0xf]
    %v82 = vld [vmem:[#allocation5 + $0x4] sm:$0xf]
    %v83 = vld [vmem:[#allocation5 + $0x8] sm:$0xf]
    %v84 = vld [vmem:[#allocation5 + $0xc] sm:$0xf]
    %v85 = vld [vmem:[#allocation5 + $0x10] sm:$0xf]
    %v86 = vld [vmem:[#allocation5 + $0x14] sm:$0xf]
    %v87 = vld [vmem:[#allocation5 + $0x18] sm:$0xf]
    %v88 = vld [vmem:[#allocation5 + $0x1c] sm:$0xf]
    %v89 = vld [vmem:[#allocation5 + $0x20] sm:$0xf]
    %v90 = vld [vmem:[#allocation5 + $0x24] sm:$0xf]
    %v91 = vld [vmem:[#allocation5 + $0x28] sm:$0xf]
    %v92 = vld [vmem:[#allocation5 + $0x2c] sm:$0xf]
    %v93 = vld [vmem:[#allocation5 + $0x30] sm:$0xf]
    %v94 = vld [vmem:[#allocation5 + $0x34] sm:$0xf]
    %v95 = vld [vmem:[#allocation5 + $0x38] sm:$0xf]
    %v96 = vld [vmem:[#allocation5 + $0x3c] sm:$0xf]
    %v97 = vld [vmem:[#allocation7] sm:$0xf]
    %v98 = vld [vmem:[#allocation7 + $0x4] sm:$0xf]
    %v99 = vld [vmem:[#allocation7 + $0x8] sm:$0xf]
    %v100 = vld [vmem:[#allocation7 + $0xc] sm:$0xf]
    %v101 = vld [vmem:[#allocation7 + $0x10] sm:$0xf]
    %v102 = vld [vmem:[#allocation7 + $0x14] sm:$0xf]
    %v103 = vld [vmem:[#allocation7 + $0x18] sm:$0xf]
    %v104 = vld [vmem:[#allocation7 + $0x1c] sm:$0xf]
    %v105 = vld [vmem:[#allocation7 + $0x20] sm:$0xf]
    %v106 = vld [vmem:[#allocation7 + $0x24] sm:$0xf]
    %v107 = vld [vmem:[#allocation7 + $0x28] sm:$0xf]
    %v108 = vld [vmem:[#allocation7 + $0x2c] sm:$0xf]
    %v109 = vld [vmem:[#allocation7 + $0x30] sm:$0xf]
    %v110 = vld [vmem:[#allocation7 + $0x34] sm:$0xf]
    %v111 = vld [vmem:[#allocation7 + $0x38] sm:$0xf]
    %v112 = vld [vmem:[#allocation7 + $0x3c] sm:$0xf]
    %v113 = vld [vmem:[#allocation8] sm:$0xf]
    %v114 = vld [vmem:[#allocation8 + $0x4] sm:$0xf]
    %v115 = vld [vmem:[#allocation8 + $0x8] sm:$0xf]
    %v116 = vld [vmem:[#allocation8 + $0xc] sm:$0xf]
    %v117 = vld [vmem:[#allocation8 + $0x10] sm:$0xf]
    %v118 = vld [vmem:[#allocation8 + $0x14] sm:$0xf]
    %v119 = vld [vmem:[#allocation8 + $0x18] sm:$0xf]
    %v120 = vld [vmem:[#allocation8 + $0x1c] sm:$0xf]
    %v121 = vld [vmem:[#allocation8 + $0x20] sm:$0xf]
    %v122 = vld [vmem:[#allocation8 + $0x24] sm:$0xf]
    %v123 = vld [vmem:[#allocation8 + $0x28] sm:$0xf]
    %v124 = vld [vmem:[#allocation8 + $0x2c] sm:$0xf]
    %v125 = vld [vmem:[#allocation8 + $0x30] sm:$0xf]
    %v126 = vld [vmem:[#allocation8 + $0x34] sm:$0xf]
    %v127 = vld [vmem:[#allocation8 + $0x38] sm:$0xf]
    %v128 = vld [vmem:[#allocation8 + $0x3c] sm:$0xf]
    %v129 = vld [vmem:[%s2] sm:$0x1]
    %v130 = vld [vmem:[%s4] sm:$0x1]
    %v131 = vld [vmem:[%s6] sm:$0x1]
    %v132 = vld [vmem:[#allocation2] sm:$0xf]
    %v134 = vlaneseq
    %v135 = vshrl.u32 %v134, 7
    %v136 = vsub.s32 0, %v135
    %v137 = vrot.slane %v129, %v136
    %v155 = vunpack.c.l.b16 %v81
    %v156 = vunpack.c.l.b16 %v82
    %v157 = vunpack.c.l.b16 %v83
    %v158 = vunpack.c.l.b16 %v84
    %v159 = vunpack.c.l.b16 %v85
    %v160 = vunpack.c.l.b16 %v86
    %v161 = vunpack.c.l.b16 %v87
    %v162 = vunpack.c.l.b16 %v88
    %v163 = vunpack.c.l.b16 %v89
    %v164 = vunpack.c.l.b16 %v90
    %v165 = vunpack.c.l.b16 %v91
    %v166 = vunpack.c.l.b16 %v92
    %v167 = vunpack.c.l.b16 %v93
    %v168 = vunpack.c.l.b16 %v94
    %v169 = vunpack.c.l.b16 %v95
    %v170 = vunpack.c.l.b16 %v96
    %v171 = vpack.c.b16 %v156, %v155
    %v172 = vpack.c.b16 %v158, %v157
    %v173 = vpack.c.b16 %v160, %v159
    %v174 = vpack.c.b16 %v162, %v161
    %v175 = vpack.c.b16 %v164, %v163
    %v176 = vpack.c.b16 %v166, %v165
    %v177 = vpack.c.b16 %v168, %v167
    %v178 = vpack.c.b16 %v170, %v169
    %187 = vmatprep.subr.bf16.mxu0 0
    %188 = vmatpush1.bf16.msra.mxu0 %v171
    %189 = vmatprep.subr.bf16.mxu0 0
    %190 = vmatpush1.bf16.msra.mxu0 %v172
    %191 = vmatprep.subr.bf16.mxu0 0
    %192 = vmatpush1.bf16.msra.mxu0 %v173
    %193 = vmatprep.subr.bf16.mxu0 0
    %194 = vmatpush1.bf16.msra.mxu0 %v174
    %195 = vmatprep.subr.bf16.mxu0 0
    %196 = vmatpush1.bf16.msra.mxu0 %v175
    %197 = vmatprep.subr.bf16.mxu0 0
    %198 = vmatpush1.bf16.msra.mxu0 %v176
    %199 = vmatprep.subr.bf16.mxu0 0
    %200 = vmatpush1.bf16.msra.mxu0 %v177
    %201 = vmatprep.subr.bf16.mxu0 0
    %202 = vmatpush1.bf16.msra.mxu0 %v178
    %203 = vmatprep.subr.bf16.mxu0 0
    %204 = vmatpush1.bf16.msra.mxu0 0
    %205 = vmatprep.subr.bf16.mxu0 0
    %206 = vmatpush1.bf16.msra.mxu0 0
    %207 = vmatprep.subr.bf16.mxu0 0
    %208 = vmatpush1.bf16.msra.mxu0 0
    %209 = vmatprep.subr.bf16.mxu0 0
    %210 = vmatpush1.bf16.msra.mxu0 0
    %211 = vmatprep.subr.bf16.mxu0 0
    %212 = vmatpush1.bf16.msra.mxu0 0
    %213 = vmatprep.subr.bf16.mxu0 0
    %214 = vmatpush1.bf16.msra.mxu0 0
    %215 = vmatprep.subr.bf16.mxu0 0
    %216 = vmatpush1.bf16.msra.mxu0 0
    %217 = vmatprep.subr.bf16.mxu0 0
    %218 = vmatpush1.bf16.msra.mxu0 0
    %219 = vmatprep.mubr.bf16.mxu0 0
    %220 = vmatmul.mubr.bf16.gmra.mrb[0].mxu0 %v132
    %v221 = vpop.f32.mrb[0].mxu0
    %v222 = vadd.f32 %v137, %v221
    %v223 = vpop.f32.mrb[0].mxu0
    %v224 = vpop.f32.mrb[0].mxu0
    %v225 = vpop.f32.mrb[0].mxu0
    %226 = vdwg.mxu0
    %v227 = vmax.f32 %v222, 0.0
    // While loop
    $region46: #{tpu_custom_call.1} parent=1 // loop_pre_header
      _
    $region47: #{tpu_custom_call.1} parent=1 // loop_header
      %s229 = sphi 0, %s457
      %s230 = sphi 0, %s458
      %v231 = vphi %v227, %v459
      %p232 = scmp.lt.s32.totalorder %s229, 5
      %p233 = scmp.eq.s32.totalorder %s230, 0
      %p234 = pnand %p232, %p233
      %p235 = pneg %p234
    $region48: #{tpu_custom_call.1} parent=1 // loop_header_branch
      %237 = sbr.rel (%p234) target = $region52
    $region49: #{tpu_custom_call.1} parent=1 // loop_body
      %v238 = vpack.c.bf16 %v231, %v231
      %v240 = vlaneseq
      %v241 = vshrl.u32 %v240, 7
      %v242 = vsub.s32 0, %v241
      %v243 = vrot.slane %v130, %v242
      %v261 = vunpack.c.l.b16 %v97
      %v262 = vunpack.c.l.b16 %v98
      %v263 = vunpack.c.l.b16 %v99
      %v264 = vunpack.c.l.b16 %v100
      %v265 = vunpack.c.l.b16 %v101
      %v266 = vunpack.c.l.b16 %v102
      %v267 = vunpack.c.l.b16 %v103
      %v268 = vunpack.c.l.b16 %v104
      %v269 = vunpack.c.l.b16 %v105
      %v270 = vunpack.c.l.b16 %v106
      %v271 = vunpack.c.l.b16 %v107
      %v272 = vunpack.c.l.b16 %v108
      %v273 = vunpack.c.l.b16 %v109
      %v274 = vunpack.c.l.b16 %v110
      %v275 = vunpack.c.l.b16 %v111
      %v276 = vunpack.c.l.b16 %v112
      %v277 = vpack.c.b16 %v262, %v261
      %v278 = vpack.c.b16 %v264, %v263
      %v279 = vpack.c.b16 %v266, %v265
      %v280 = vpack.c.b16 %v268, %v267
      %v281 = vpack.c.b16 %v270, %v269
      %v282 = vpack.c.b16 %v272, %v271
      %v283 = vpack.c.b16 %v274, %v273
      %v284 = vpack.c.b16 %v276, %v275
      %293 = vmatprep.subr.bf16.mxu0 0
      %294 = vmatpush1.bf16.msra.mxu0 %v277
      %295 = vmatprep.subr.bf16.mxu0 0
      %296 = vmatpush1.bf16.msra.mxu0 %v278
      %297 = vmatprep.subr.bf16.mxu0 0
      %298 = vmatpush1.bf16.msra.mxu0 %v279
      %299 = vmatprep.subr.bf16.mxu0 0
      %300 = vmatpush1.bf16.msra.mxu0 %v280
      %301 = vmatprep.subr.bf16.mxu0 0
      %302 = vmatpush1.bf16.msra.mxu0 %v281
      %303 = vmatprep.subr.bf16.mxu0 0
      %304 = vmatpush1.bf16.msra.mxu0 %v282
      %305 = vmatprep.subr.bf16.mxu0 0
      %306 = vmatpush1.bf16.msra.mxu0 %v283
      %307 = vmatprep.subr.bf16.mxu0 0
      %308 = vmatpush1.bf16.msra.mxu0 %v284
      %309 = vmatprep.subr.bf16.mxu0 0
      %310 = vmatpush1.bf16.msra.mxu0 0
      %311 = vmatprep.subr.bf16.mxu0 0
      %312 = vmatpush1.bf16.msra.mxu0 0
      %313 = vmatprep.subr.bf16.mxu0 0
      %314 = vmatpush1.bf16.msra.mxu0 0
      %315 = vmatprep.subr.bf16.mxu0 0
      %316 = vmatpush1.bf16.msra.mxu0 0
      %317 = vmatprep.subr.bf16.mxu0 0
      %318 = vmatpush1.bf16.msra.mxu0 0
      %319 = vmatprep.subr.bf16.mxu0 0
      %320 = vmatpush1.bf16.msra.mxu0 0
      %321 = vmatprep.subr.bf16.mxu0 0
      %322 = vmatpush1.bf16.msra.mxu0 0
      %323 = vmatprep.subr.bf16.mxu0 0
      %324 = vmatpush1.bf16.msra.mxu0 0
      %325 = vmatprep.mubr.bf16.mxu0 0
      %326 = vmatmul.mubr.bf16.gmra.mrb[0].mxu0 %v238
      %v327 = vpop.f32.mrb[0].mxu0
      %v328 = vadd.f32 %v243, %v327
      %v329 = vpop.f32.mrb[0].mxu0
      %v330 = vpop.f32.mrb[0].mxu0
      %v331 = vpop.f32.mrb[0].mxu0
      %332 = vdwg.mxu0
      %v333 = vmax.f32 %v328, 0.0
      %v334 = vpack.c.bf16 %v333, %v333
      %v336 = vlaneseq
      %v337 = vshrl.u32 %v336, 7
      %v338 = vsub.s32 0, %v337
      %v339 = vrot.slane %v131, %v338
      %v357 = vunpack.c.l.b16 %v113
      %v358 = vunpack.c.l.b16 %v114
      %v359 = vunpack.c.l.b16 %v115
      %v360 = vunpack.c.l.b16 %v116
      %v361 = vunpack.c.l.b16 %v117
      %v362 = vunpack.c.l.b16 %v118
      %v363 = vunpack.c.l.b16 %v119
      %v364 = vunpack.c.l.b16 %v120
      %v365 = vunpack.c.l.b16 %v121
      %v366 = vunpack.c.l.b16 %v122
      %v367 = vunpack.c.l.b16 %v123
      %v368 = vunpack.c.l.b16 %v124
      %v369 = vunpack.c.l.b16 %v125
      %v370 = vunpack.c.l.b16 %v126
      %v371 = vunpack.c.l.b16 %v127
      %v372 = vunpack.c.l.b16 %v128
      %v373 = vpack.c.b16 %v358, %v357
      %v374 = vpack.c.b16 %v360, %v359
      %v375 = vpack.c.b16 %v362, %v361
      %v376 = vpack.c.b16 %v364, %v363
      %v377 = vpack.c.b16 %v366, %v365
      %v378 = vpack.c.b16 %v368, %v367
      %v379 = vpack.c.b16 %v370, %v369
      %v380 = vpack.c.b16 %v372, %v371
      %389 = vmatprep.subr.bf16.mxu0 0
      %390 = vmatpush1.bf16.msra.mxu0 %v373
      %391 = vmatprep.subr.bf16.mxu0 0
      %392 = vmatpush1.bf16.msra.mxu0 %v374
      %393 = vmatprep.subr.bf16.mxu0 0
      %394 = vmatpush1.bf16.msra.mxu0 %v375
      %395 = vmatprep.subr.bf16.mxu0 0
      %396 = vmatpush1.bf16.msra.mxu0 %v376
      %397 = vmatprep.subr.bf16.mxu0 0
      %398 = vmatpush1.bf16.msra.mxu0 %v377
      %399 = vmatprep.subr.bf16.mxu0 0
      %400 = vmatpush1.bf16.msra.mxu0 %v378
      %401 = vmatprep.subr.bf16.mxu0 0
      %402 = vmatpush1.bf16.msra.mxu0 %v379
      %403 = vmatprep.subr.bf16.mxu0 0
      %404 = vmatpush1.bf16.msra.mxu0 %v380
      %405 = vmatprep.subr.bf16.mxu0 0
      %406 = vmatpush1.bf16.msra.mxu0 0
      %407 = vmatprep.subr.bf16.mxu0 0
      %408 = vmatpush1.bf16.msra.mxu0 0
      %409 = vmatprep.subr.bf16.mxu0 0
      %410 = vmatpush1.bf16.msra.mxu0 0
      %411 = vmatprep.subr.bf16.mxu0 0
      %412 = vmatpush1.bf16.msra.mxu0 0
      %413 = vmatprep.subr.bf16.mxu0 0
      %414 = vmatpush1.bf16.msra.mxu0 0
      %415 = vmatprep.subr.bf16.mxu0 0
      %416 = vmatpush1.bf16.msra.mxu0 0
      %417 = vmatprep.subr.bf16.mxu0 0
      %418 = vmatpush1.bf16.msra.mxu0 0
      %419 = vmatprep.subr.bf16.mxu0 0
      %420 = vmatpush1.bf16.msra.mxu0 0
      %421 = vmatprep.mubr.bf16.mxu0 0
      %422 = vmatmul.mubr.bf16.gmra.mrb[0].mxu0 %v334
      %v423 = vpop.f32.mrb[0].mxu0
      %v424 = vadd.f32 %v339, %v423
      %v425 = vpop.f32.mrb[0].mxu0
      %v426 = vpop.f32.mrb[0].mxu0
      %v427 = vpop.f32.mrb[0].mxu0
      %428 = vdwg.mxu0
      %429 = vst [vmem:[#allocation10] sm:$0xff] %v424
      %430 = vmax.xlane.f32.xlu0 %v424
      %v431 = vpop.xlane.xlu0 %430
      %v432 = vsub.f32 %v424, %v431
      %v433 = vmul.f32 %v432, 1.442695
      %v434 = vpow.pop %v433
      %435 = vadd.xlane.f32.xlu0 %v434
      %v436 = vpop.xlane.xlu0 %435
      %v437 = vmul.f32 %v432, %v434
      %438 = vadd.xlane.f32.xlu0 %v437
      %v439 = vpop.xlane.xlu0 %438
      %v440 = vlog2.pop %v436
      %v441 = vmul.f32 %v440, 0.6931472
      %v442 = vrcp.pop %v436
      %v443 = vmul.f32 %v439, %v442
      %v444 = vsub.f32 %v441, %v443
      %vm445 = vcmask 7168
      %v446 = vsel %vm445, %v444, 0.0
      %447 = vadd.xlane.f32.xlu0 %v446
      %v448 = vpop.xlane.xlu0 %447
      %v449 = vrot.slane %v448, 4
      %v450 = vadd.f32 %v448, %v449
      %v451 = vrot.slane %v450, 2
      %v452 = vadd.f32 %v450, %v451
      %v453 = vrot.slane %v452, 1
      %v454 = vadd.f32 %v452, %v453
      %s455 = vtos %v454
      %p456 = scmp.lt.f32.partialorder %s455, 4.0
      %s457 = sadd.s32 %s229, 1
      %s458 = scalar_select %p456, 1, 0
      %v459 = vadd.f32 %v231, %v333
    $region50: #{tpu_custom_call.1} parent=1 // loop_footer
      _
    $region51: #{tpu_custom_call.1} parent=1 // loop_footer_branch
      %228 = sbr.rel target = $region47
    $region52: #{tpu_custom_call.1} parent=1 // loop_exit
      _
    // Predicated region
    $region53: #{tpu_custom_call.1} parent=1 // pred_check
      _
    $region54: #{tpu_custom_call.1} parent=1 // pred_check_branch
      %461 = sbr.rel (0) target = $region56
    $region55: #{tpu_custom_call.1} parent=1 // pred_region
      %s463 = ssub.s32 128, 128
      %464 = vsyncadd [#allocation4], %s463
      %s466 = sshll.u32 [#allocation10], 4
      %s467 = int_to_ptr.vmem [resolvable:$true] %s466
      %469 = dma.vmem_to_hbm [thread:$0]  %s467, 128, %s7, [#allocation4]
    $region56: #{tpu_custom_call.1} parent=1 // pred_fallthru
      _
    // Predicated region
    $region57: #{tpu_custom_call.1} parent=1 // pred_check
      _
    $region58: #{tpu_custom_call.1} parent=1 // pred_check_branch
      %471 = sbr.rel (0) target = $region60
    $region59: #{tpu_custom_call.1} parent=1 // pred_region
      %472 = dma.done [#allocation4], 128
    $region60: #{tpu_custom_call.1} parent=1 // pred_fallthru
      _
    %473 = vsyncpa [#allocation3], 1
    %474 = vsyncpa [#allocation6], 1
    %475 = vsyncpa [#allocation9], 1
    %476 = vsyncpa [#allocation4], 1

</llo_original>
